<compile_context>
chip_gen: v6e
topology: v6e:2x2x1
jax: 0.10.0
libtpu: 0.0.40
codegen_flags: <defaults>
</compile_context>

<pallas_src>
import functools

import jax
import jax.numpy as jnp
from jax.experimental import pallas as pl
from jax.experimental.pallas import tpu as pltpu

# Multiple of 8 (f32) and 32 (int8 mask) sublane tiling requirements.
_SUBLANE_GRANULARITY = 32


def _only_markov_kernel(w_ref, xm_ref, mask_ref, o_ref, *, decision_focused):
    # Linear(1,1) scale from SMEM; the bias is a constant row shift and cancels
    # exactly under log_softmax, so it never enters the kernel.
    w = w_ref[0]
    s = xm_ref[...].astype(jnp.float32) * w                       # (TB, N) VPU

    # log_softmax over the node (lane) axis.
    m = jnp.max(s, axis=1, keepdims=True)                         # XLU reduce
    z = s - m
    lse = jnp.log(jnp.sum(jnp.exp(z), axis=1, keepdims=True))     # EUP + XLU
    logp = z - lse

    # masked_fill fused into the epilogue; mask kept in its narrow dtype.
    masked = mask_ref[...] != 0
    if decision_focused:
        o_ref[...] = jnp.where(masked, jnp.float32(1e8), -logp)
    else:
        o_ref[...] = jnp.where(masked, jnp.float32(-1e8), logp)


def _round_up(x, m):
    return ((x + m - 1) // m) * m


def _choose_batch_tile(B, batch_tile):
    """Big tiles (low per-step overhead), but >= 2 grid steps when possible so
    the 'parallel' grid axis can shard across v7x's two TensorCores."""
    if B <= _SUBLANE_GRANULARITY:
        return B                                   # full-extent single block
    if B > batch_tile:
        return batch_tile
    tb = _round_up(pl.cdiv(B, 2), _SUBLANE_GRANULARITY)
    return tb if tb < B else B


def _reference(x_markov, x_mask, params, *, decision_focused=False):
    """Pure-JAX reference of the PyTorch forward (also the tiny-shape path)."""
    w = jnp.reshape(params["w"], ()).astype(jnp.float32)
    b = jnp.reshape(params["b"], ()).astype(jnp.float32)
    s = x_markov.astype(jnp.float32) * w + b
    logp = jax.nn.log_softmax(s, axis=1)
    if decision_focused:
        return jnp.where(x_mask.astype(bool), jnp.float32(1e8), -logp)
    return jnp.where(x_mask.astype(bool), jnp.float32(-1e8), logp)


def only_markov_forward(x_markov, x_mask, params, *, decision_focused=False,
                        batch_tile=2048, min_pallas_elems=65536,
                        force_pallas=False):
    """Pallas implementation of OnlyMarkov.forward's hot path."""
    B, N = x_markov.shape

    if not force_pallas and B * N < min_pallas_elems:
        # Tiny problem: a Pallas custom call is pure launch overhead and a
        # fusion barrier; let XLA fuse scale + log_softmax + select instead.
        return _reference(x_markov, x_mask, params,
                          decision_focused=decision_focused)

    # Only the Linear(1,1) weight matters in-kernel (bias cancels).
    w = jnp.reshape(params["w"], (1,)).astype(jnp.float32)

    TB = _choose_batch_tile(B, batch_tile)
    grid = (pl.cdiv(B, TB),)

    kernel = functools.partial(_only_markov_kernel,
                               decision_focused=decision_focused)
    return pl.pallas_call(
        kernel,
        out_shape=jax.ShapeDtypeStruct((B, N), jnp.float32),
        grid=grid,
        in_specs=[
            pl.BlockSpec(memory_space=pltpu.MemorySpace.SMEM),   # [w] scalar
            pl.BlockSpec((TB, N), lambda i: (i, 0)),             # x_markov tile
            pl.BlockSpec((TB, N), lambda i: (i, 0)),             # x_mask tile (native narrow dtype)
        ],
        out_specs=pl.BlockSpec((TB, N), lambda i: (i, 0)),
        compiler_params=pltpu.CompilerParams(
            dimension_semantics=("parallel",)),
    )(w, x_markov, x_mask)


def only_markov_pred(stops, x, x_dist, x_features, x_markov, x_week, x_mask,
                     params, *, decision_focused=False, **kw):
    """Mirrors OnlyMarkov.forward's signature; only x_markov / x_mask are used."""
    del stops, x, x_dist, x_features, x_week  # unused by the module's forward
    return only_markov_forward(x_markov, x_mask, params,
                               decision_focused=decision_focused, **kw)


if __name__ == "__main__":
    # Module-default shapes: batch=4, lookback=8, nnodes=74, emb=8, feats=2, wk=7.
    B, L, N, E, F, W = 4, 8, 74, 8, 2, 7
    key = jax.random.PRNGKey(0)
    ks = jax.random.split(key, 12)

    stops = None                                                # unused
    x = jax.random.normal(ks[0], (B, L, N), jnp.float32)        # unused
    x_dist = jax.random.normal(ks[1], (B, N), jnp.float32)      # unused
    x_features = jax.random.normal(ks[2], (B, F), jnp.float32)  # unused
    x_week = jax.random.randint(ks[3], (B,), 0, W)              # unused
    # mask constructed in its native narrow dtype -> no wrapper cast pass
    x_mask = (jax.random.uniform(ks[4], (B, N)) < 0.2).astype(jnp.int8)
    x_markov = jax.random.normal(ks[5], (B, N), jnp.float32)

    params = {
        "w": jax.random.normal(ks[6], (1, 1), jnp.float32),     # nn.Linear(1,1).weight
        "b": jax.random.normal(ks[7], (1,), jnp.float32) * 0.1,  # nn.Linear(1,1).bias
    }

    # --- tiny module-default shape, forced through the Pallas path ----------
    for df in (False, True):
        out = only_markov_pred(stops, x, x_dist, x_features, x_markov, x_week,
                               x_mask, params, decision_focused=df,
                               force_pallas=True)
        out = jax.block_until_ready(out)
        ref = _reference(x_markov, x_mask, params, decision_focused=df)
        err = float(jnp.max(jnp.abs(out - ref)))
        assert jnp.allclose(out, ref, atol=1e-4, rtol=1e-5), (df, err)

    # --- tiny shape, default dispatch (pure-JAX fallback path) --------------
    out_small = jax.block_until_ready(
        only_markov_forward(x_markov, x_mask, params))
    ref_small = _reference(x_markov, x_mask, params)
    assert jnp.allclose(out_small, ref_small, atol=1e-4, rtol=1e-5)

    # --- larger batch: exercises batch tiling (>=2 grid steps, int8 mask) ---
    B2 = 1024
    xm2 = jax.random.normal(ks[8], (B2, N), jnp.float32)
    mask2 = (jax.random.uniform(ks[9], (B2, N)) < 0.2).astype(jnp.int8)
    for df in (False, True):
        out2 = only_markov_forward(xm2, mask2, params, decision_focused=df)
        out2 = jax.block_until_ready(out2)
        ref2 = _reference(xm2, mask2, params, decision_focused=df)
        err2 = float(jnp.max(jnp.abs(out2 - ref2)))
        assert jnp.allclose(out2, ref2, atol=1e-4, rtol=1e-5), (df, err2)

    print("KERNEL_OK")
</pallas_src>

<mosaic_0001>
module attributes {stable_mosaic.version = 11 : i64} {
  func.func @_only_markov_kernel(%arg0: i32, %arg1: memref<1xf32, #tpu.memory_space<smem>>, %arg2: memref<4x74xf32, #tpu.memory_space<vmem>>, %arg3: memref<4x74xi8, #tpu.memory_space<vmem>>, %arg4: memref<4x74xf32, #tpu.memory_space<vmem>>) attributes {dimension_semantics = [#tpu.dimension_semantics<parallel>], iteration_bounds = array<i64: 1>, scalar_prefetch = 0 : i64, scratch_operands = 0 : i64, tpu.core_type = #tpu.core_type<tc>, window_params = [{transform_indices = @transform_0, window_bounds = array<i64: 1>}, {transform_indices = @transform_1, window_bounds = array<i64: 4, 74>}, {transform_indices = @transform_2, window_bounds = array<i64: 4, 74>}, {transform_indices = @transform_3, window_bounds = array<i64: 4, 74>}]} {
    %c0 = arith.constant 0 : index
    %0 = memref.load %arg1[%c0] : memref<1xf32, #tpu.memory_space<smem>>
    %c0_0 = arith.constant 0 : index
    %c0_1 = arith.constant 0 : index
    %1 = vector.load %arg2[%c0_0, %c0_1] : memref<4x74xf32, #tpu.memory_space<vmem>>, vector<4x74xf32>
    %2 = vector.broadcast %0 : f32 to vector<4x74xf32>
    %3 = arith.mulf %1, %2 : vector<4x74xf32>
    %cst = arith.constant dense<0xFF800000> : vector<4xf32>
    %4 = vector.multi_reduction <maximumf>, %3, %cst [1] : vector<4x74xf32> to vector<4xf32>
    %5 = vector.shape_cast %4 : vector<4xf32> to vector<4x1xf32>
    %6 = vector.broadcast %5 : vector<4x1xf32> to vector<4x74xf32>
    %7 = arith.subf %3, %6 : vector<4x74xf32>
    %8 = math.exp %7 : vector<4x74xf32>
    %cst_2 = arith.constant dense<0.000000e+00> : vector<4xf32>
    %9 = vector.multi_reduction <add>, %8, %cst_2 [1] : vector<4x74xf32> to vector<4xf32>
    %10 = vector.shape_cast %9 : vector<4xf32> to vector<4x1xf32>
    %11 = math.log %10 : vector<4x1xf32>
    %12 = vector.broadcast %11 : vector<4x1xf32> to vector<4x74xf32>
    %13 = arith.subf %7, %12 : vector<4x74xf32>
    %c0_3 = arith.constant 0 : index
    %c0_4 = arith.constant 0 : index
    %14 = vector.load %arg3[%c0_3, %c0_4] : memref<4x74xi8, #tpu.memory_space<vmem>>, vector<4x74xi8>
    %c0_i8 = arith.constant 0 : i8
    %15 = vector.broadcast %c0_i8 : i8 to vector<4x74xi8>
    %16 = arith.cmpi ne, %14, %15 : vector<4x74xi8>
    %cst_5 = arith.constant -1.000000e+08 : f32
    %17 = vector.broadcast %cst_5 : f32 to vector<4x74xf32>
    %18 = arith.select %16, %17, %13 : vector<4x74xi1>, vector<4x74xf32>
    %c0_6 = arith.constant 0 : index
    %c0_7 = arith.constant 0 : index
    %19 = vector.load %arg4[%c0_6, %c0_7] : memref<4x74xf32, #tpu.memory_space<vmem>>, vector<4x74xf32>
    tpu.vector_store %arg4[%c0_6, %c0_7], %18 {strides = array<i32>} : memref<4x74xf32, #tpu.memory_space<vmem>>, vector<4x74xf32>,
    return
  }
  func.func @transform_0(%arg0: i32) -> i32 {
    %c0_i32 = arith.constant 0 : i32
    %c0_i32_0 = arith.constant 0 : i32
    return %c0_i32 : i32
  }
  func.func @transform_1(%arg0: i32) -> (i32, i32) {
    %c0_i32 = arith.constant 0 : i32
    %c0_i32_0 = arith.constant 0 : i32
    return %arg0, %c0_i32 : i32, i32
  }
  func.func @transform_2(%arg0: i32) -> (i32, i32) {
    %c0_i32 = arith.constant 0 : i32
    %c0_i32_0 = arith.constant 0 : i32
    return %arg0, %c0_i32 : i32, i32
  }
  func.func @transform_3(%arg0: i32) -> (i32, i32) {
    %c0_i32 = arith.constant 0 : i32
    %c0_i32_0 = arith.constant 0 : i32
    return %arg0, %c0_i32 : i32, i32
  }
}

</mosaic_0001>

<llo_original>
// kernel: tpu_custom_call.1
$region0: #{tpu_custom_call.1}
  #allocation0 [shape = 'u32[]', space=smem, size = 0x4, offset = 0x4, fixed_abs, tag = 'smem constant byte address 0x4 - core index']
  #allocation1 [shape = 'u32[144,128]{1,0:T(1,128)}', space=vmem, size = 0x12000, scoped, tag = 'internal scratch']
  #allocation2 [shape = 'f32[1]{0:T(128)S(6)}', space=smem, size = 0x200, scoped, tag = 'scoped memory for tpu_custom_call.1']
  %s0 = inlined_call_operand.<no memory space> [shape: f32[1], index: 0, kind: input, shape index: {}]
  %s1 = inlined_call_operand.hbm [shape: f32[4,74], index: 1, kind: input, shape index: {}]
  %s2 = inlined_call_operand.vmem [shape: s8[4,74], index: 2, kind: input, shape index: {}]
  %s3 = inlined_call_operand.hbm [shape: f32[4,74], index: 3, kind: output, shape index: {}]
  %s4 = sld [smem:[#allocation0]]
  $region26: #{tpu_custom_call.1} parent=0
    _
  %s6 = ssub.s32 1, %s4
  %s7 = scalar_select 0, %s6, %s4
  %8 = sst [smem:[#allocation2]] %s0
  $region1: #{tpu_custom_call.1} parent=0
    #allocation3 [shape = 'u8[2048]{0}', space=vmem, size = 0x800, scoped, tag = 'input window, operand 1, single buffered']
    #allocation4 [shape = 's32[1]{0}', space=sflag, size = 0x4, scoped, tag = 'scoped memory for tpu_custom_call.1']
    #allocation5 [shape = 's32[1]{0}', space=sflag, size = 0x4, scoped, tag = 'scoped memory for tpu_custom_call.1']
    #allocation6 [shape = 'u8[2048]{0}', space=vmem, size = 0x800, scoped, tag = 'output window, operand 0, single buffered']
    %9 = vsyncpa [#allocation4], 0
    %10 = vsyncpa [#allocation5], 0
    // Predicated region
    $region2: #{tpu_custom_call.1} parent=1 // pred_check
      _
    $region3: #{tpu_custom_call.1} parent=1 // pred_check_branch
      %12 = sbr.rel (0) target = $region5
    $region4: #{tpu_custom_call.1} parent=1 // pred_region
      _
    $region5: #{tpu_custom_call.1} parent=1 // pred_fallthru
      _
    // Predicated region
    $region6: #{tpu_custom_call.1} parent=1 // pred_check
      _
    $region7: #{tpu_custom_call.1} parent=1 // pred_check_branch
      %14 = sbr.rel (0) target = $region9
    $region8: #{tpu_custom_call.1} parent=1 // pred_region
      %s16 = ssub.s32 64, 64
      %17 = vsyncadd [#allocation4], %s16
      %s19 = sshll.u32 [#allocation3], 4
      %s20 = int_to_ptr.vmem [resolvable:$true] %s19
      %22 = dma.hbm_to_vmem [thread:$0]  %s1, 64, %s20, [#allocation4]
    $region9: #{tpu_custom_call.1} parent=1 // pred_fallthru
      _
    // Predicated region
    $region10: #{tpu_custom_call.1} parent=1 // pred_check
      _
    $region11: #{tpu_custom_call.1} parent=1 // pred_check_branch
      %24 = sbr.rel (0) target = $region13
    $region12: #{tpu_custom_call.1} parent=1 // pred_region
      _
    $region13: #{tpu_custom_call.1} parent=1 // pred_fallthru
      _
    // Predicated region
    $region14: #{tpu_custom_call.1} parent=1 // pred_check
      _
    $region15: #{tpu_custom_call.1} parent=1 // pred_check_branch
      %26 = sbr.rel (0) target = $region17
    $region16: #{tpu_custom_call.1} parent=1 // pred_region
      %27 = dma.done [#allocation4], 64
    $region17: #{tpu_custom_call.1} parent=1 // pred_fallthru
      _
    %s30 = sld [smem:[#allocation2]]
    %v31 = vld [vmem:[#allocation3] sm:$0xf]
    %v32 = vstv %s30
    %v33 = vmul.f32 %v31, %v32
    %vm34 = vcmask 601088
    %v35 = vsel %vm34, %v33, -inf
    %36 = vmax.xlane.f32.xlu0 %v35
    %v37 = vpop.xlane.xlu0 %36
    %v38 = vsub.f32 %v33, %v37
    %v39 = vmul.f32 %v38, 1.442695
    %v40 = vpow.pop %v39
    %v41 = vsel %vm34, %v40, 0.0
    %42 = vadd.xlane.f32.xlu0 %v41
    %v43 = vpop.xlane.xlu0 %42
    %v44 = vlog2.pop %v43
    %v45 = vmul.f32 %v44, 0.6931472
    %v46 = vsub.f32 %v38, %v45
    %v47 = vld [vmem:[%s2] sm:$0x1]
    %vm48 = vnez %v47
    %v49 = vsel %vm48, 16843009, 0
    %v50 = vunpack.c.0.s8 %v49
    %vm51 = vcmp.ne.s32.totalorder %v50, 0
    %v52 = vsel %vm51, -1e+08, %v46
    %53 = vst.msk [vmem:[#allocation6] sm:$0xf] %vm34, %v52
    // Predicated region
    $region18: #{tpu_custom_call.1} parent=1 // pred_check
      _
    $region19: #{tpu_custom_call.1} parent=1 // pred_check_branch
      %55 = sbr.rel (0) target = $region21
    $region20: #{tpu_custom_call.1} parent=1 // pred_region
      %s57 = ssub.s32 64, 64
      %58 = vsyncadd [#allocation5], %s57
      %s60 = sshll.u32 [#allocation6], 4
      %s61 = int_to_ptr.vmem [resolvable:$true] %s60
      %63 = dma.vmem_to_hbm [thread:$0]  %s61, 64, %s3, [#allocation5]
    $region21: #{tpu_custom_call.1} parent=1 // pred_fallthru
      _
    // Predicated region
    $region22: #{tpu_custom_call.1} parent=1 // pred_check
      _
    $region23: #{tpu_custom_call.1} parent=1 // pred_check_branch
      %65 = sbr.rel (0) target = $region25
    $region24: #{tpu_custom_call.1} parent=1 // pred_region
      %66 = dma.done [#allocation5], 64
    $region25: #{tpu_custom_call.1} parent=1 // pred_fallthru
      _
    %67 = vsyncpa [#allocation4], 1
    %68 = vsyncpa [#allocation5], 1

</llo_original>
